<compile_context>
chip_gen: v6e
topology: v6e:2x2x1
jax: 0.10.0
libtpu: 0.0.40
codegen_flags: <defaults>
</compile_context>

<pallas_src>
import functools

import jax
import jax.numpy as jnp
import numpy as np
from jax import lax
from jax.experimental import pallas as pl
from jax.experimental.pallas import tpu as pltpu


def _round_up(n, m):
    return ((n + m - 1) // m) * m


def _pad2d(a, rows, cols):
    r, c = a.shape
    if r == rows and c == cols:
        return a
    return jnp.pad(a, ((0, rows - r), (0, cols - c)))


def encoder_kernel(x_ref, wq1_ref, bq1_ref, wq2_ref, bq2_ref,
                   wp1_ref, bp1_ref, d_ref, ssq_ref):
    """Accumulate x @ wq1 + row sumsq over K; finalize normalize/tanh/q2/p1."""
    k = pl.program_id(1)

    @pl.when(k == 0)
    def _init():
        d_ref[...] = jnp.zeros_like(d_ref)
        ssq_ref[...] = jnp.zeros_like(ssq_ref)

    x = x_ref[...]
    # d_ref doubles as the f32 accumulator for x @ wq1 (resident across k).
    d_ref[...] += jnp.dot(x, wq1_ref[...], preferred_element_type=jnp.float32)
    ssq_ref[...] += jnp.sum(x * x, axis=1, keepdims=True)

    @pl.when(k == pl.num_programs(1) - 1)
    def _finalize():
        # F.normalize(x, p=2, dim=1, eps=1e-12):  x / max(||x||, 1e-12)
        # applied after the matmul: (x @ W) * (1 / max(||x||, eps)).
        inv_norm = lax.rsqrt(jnp.maximum(ssq_ref[...], 1e-24))
        h1 = jnp.tanh(d_ref[...] * inv_norm + bq1_ref[...])
        # q_layers[1], mu half only (eval: z = mu).
        z = jnp.dot(h1, wq2_ref[...],
                    preferred_element_type=jnp.float32) + bq2_ref[...]
        # p_layers[0] + tanh
        d = jnp.tanh(jnp.dot(z, wp1_ref[...],
                             preferred_element_type=jnp.float32) + bp1_ref[...])
        d_ref[...] = d


def decoder_kernel(d_ref, wp2_ref, bp2_ref, res_ref):
    """res block = d @ wp2_block + bp2_block (p_layers[1], no activation)."""
    res_ref[...] = (jnp.dot(d_ref[...], wp2_ref[...],
                            preferred_element_type=jnp.float32)
                    + bp2_ref[...]).astype(res_ref.dtype)


def multivae_linear_forward(x, params, latent, *, tile_m=256, tile_kn=512,
                            big_weight_dtype=None):
    wq1, bq1, wq2, bq2, wp1, bp1, wp2, bp2 = params
    B, n_items = x.shape
    hidden = wq1.shape[1]

    LANE = 128
    hidden_p = _round_up(hidden, LANE)
    latent_p = _round_up(latent, LANE)
    tile_m = max(8, min(tile_m, _round_up(B, 8)))
    tile_kn = max(LANE, min(tile_kn, _round_up(n_items, LANE)))
    B_p = _round_up(B, tile_m)
    ni_p = _round_up(n_items, tile_kn)
    num_m = B_p // tile_m
    num_kn = ni_p // tile_kn

    wdt = big_weight_dtype if big_weight_dtype is not None else x.dtype

    # Zero-padding is numerically inert: padded x cols hit zero wq1 rows,
    # padded hidden/latent channels carry zero weights/biases end to end.
    xp = _pad2d(x, B_p, ni_p)
    wq1p = _pad2d(wq1, ni_p, hidden_p).astype(wdt)
    bq1p = _pad2d(bq1, 1, hidden_p)
    wq2p = _pad2d(wq2[:, :latent], hidden_p, latent_p)   # mu half only
    bq2p = _pad2d(bq2[:, :latent], 1, latent_p)
    wp1p = _pad2d(wp1, latent_p, hidden_p)
    bp1p = _pad2d(bp1, 1, hidden_p)
    wp2p = _pad2d(wp2, hidden_p, ni_p).astype(wdt)
    bp2p = _pad2d(bp2, 1, ni_p)

    f32b = 4
    enc_cost = pl.CostEstimate(
        flops=2 * B_p * ni_p * hidden_p
              + 2 * B_p * hidden_p * latent_p
              + 2 * B_p * latent_p * hidden_p,
        transcendentals=2 * B_p * hidden_p,
        bytes_accessed=(B_p * ni_p + ni_p * hidden_p + hidden_p * latent_p
                        + latent_p * hidden_p + B_p * hidden_p) * f32b,
    )

    d = pl.pallas_call(
        encoder_kernel,
        out_shape=jax.ShapeDtypeStruct((B_p, hidden_p), jnp.float32),
        grid_spec=pltpu.PrefetchScalarGridSpec(
            num_scalar_prefetch=0,
            grid=(num_m, num_kn),
            in_specs=[
                pl.BlockSpec((tile_m, tile_kn), lambda i, k: (i, k)),      # x
                pl.BlockSpec((tile_kn, hidden_p), lambda i, k: (k, 0)),    # wq1
                pl.BlockSpec((1, hidden_p), lambda i, k: (0, 0)),          # bq1
                pl.BlockSpec((hidden_p, latent_p), lambda i, k: (0, 0)),   # wq2(mu)
                pl.BlockSpec((1, latent_p), lambda i, k: (0, 0)),          # bq2(mu)
                pl.BlockSpec((latent_p, hidden_p), lambda i, k: (0, 0)),   # wp1
                pl.BlockSpec((1, hidden_p), lambda i, k: (0, 0)),          # bp1
            ],
            out_specs=pl.BlockSpec((tile_m, hidden_p), lambda i, k: (i, 0)),
            scratch_shapes=[pltpu.VMEM((tile_m, 1), jnp.float32)],         # sumsq
        ),
        compiler_params=pltpu.CompilerParams(
            dimension_semantics=("parallel", "arbitrary")),
        cost_estimate=enc_cost,
    )(xp, wq1p, bq1p, wq2p, bq2p, wp1p, bp1p)

    dec_cost = pl.CostEstimate(
        flops=2 * B_p * hidden_p * ni_p,
        transcendentals=0,
        bytes_accessed=(B_p * hidden_p + hidden_p * ni_p + B_p * ni_p) * f32b,
    )

    res_p = pl.pallas_call(
        decoder_kernel,
        out_shape=jax.ShapeDtypeStruct((B_p, ni_p), jnp.float32),
        grid_spec=pltpu.PrefetchScalarGridSpec(
            num_scalar_prefetch=0,
            grid=(num_m, num_kn),
            in_specs=[
                pl.BlockSpec((tile_m, hidden_p), lambda i, j: (i, 0)),     # d
                pl.BlockSpec((hidden_p, tile_kn), lambda i, j: (0, j)),    # wp2
                pl.BlockSpec((1, tile_kn), lambda i, j: (0, j)),           # bp2
            ],
            out_specs=pl.BlockSpec((tile_m, tile_kn), lambda i, j: (i, j)),
        ),
        compiler_params=pltpu.CompilerParams(
            dimension_semantics=("parallel", "parallel")),
        cost_estimate=dec_cost,
    )(d, wp2p, bp2p)

    res = res_p[:B, :n_items]
    # stage == 'backbone': confidence is zeros; produced in the wrapper so the
    # kernel does not DMA a second (B, n_items) zero tensor out of VMEM.
    c = jnp.zeros_like(res)
    return res, c


def make_linear(key, d_in, d_out, w_std, b_std=0.001):
    kw, kb = jax.random.split(key)
    w = jax.random.normal(kw, (d_in, d_out), jnp.float32) * w_std  # pre-transposed
    b = jax.random.normal(kb, (1, d_out), jnp.float32) * b_std
    return w, b


def build_params(key, p_dims):
    # p_dims = [latent, hidden, n_items]; q_dims = reversed; last q-layer out = 2*latent
    q_dims = p_dims[::-1]
    temp_q_dims = q_dims[:-1] + [q_dims[-1] * 2]
    keys = jax.random.split(key, 4)
    params = []
    for i, (d_in, d_out) in enumerate(zip(temp_q_dims[:-1], temp_q_dims[1:])):
        std = float(np.sqrt(2.0 / (d_in + d_out)))
        params.extend(make_linear(keys[i], d_in, d_out, std))
    for i, (d_in, d_out) in enumerate(zip(p_dims[:-1], p_dims[1:])):
        std = float(np.sqrt(2.0 / (d_in + d_out)))
        params.extend(make_linear(keys[2 + i], d_in, d_out, std))
    return params


def reference_forward(x, params, latent):
    wq1, bq1, wq2, bq2, wp1, bp1, wp2, bp2 = params
    norm = jnp.sqrt(jnp.sum(x * x, axis=1, keepdims=True))
    h = x / jnp.maximum(norm, 1e-12)
    h = jnp.tanh(h @ wq1 + bq1)
    h = h @ wq2 + bq2
    z = h[:, :latent]
    d = jnp.tanh(z @ wp1 + bp1)
    res = d @ wp2 + bp2
    return res, jnp.zeros_like(res)


if __name__ == "__main__":
    # Small shapes chosen to exercise batch / lane / n_items padding and a
    # multi-step (M, K/N) grid: p_dims = [latent, hidden, n_items].
    latent, hidden, n_items = 64, 96, 300
    p_dims = [latent, hidden, n_items]
    B = 12

    root = jax.random.PRNGKey(0)
    k_x, k_p = jax.random.split(root)
    x = jax.random.uniform(k_x, (B, n_items), jnp.float32)
    params = build_params(k_p, p_dims)

    res, c = multivae_linear_forward(x, params, latent, tile_m=8, tile_kn=128)
    res, c = jax.block_until_ready((res, c))

    res_ref, c_ref = reference_forward(x, params, latent)
    assert res.shape == (B, n_items) and c.shape == (B, n_items)
    np.testing.assert_allclose(np.asarray(res), np.asarray(res_ref),
                               rtol=1e-5, atol=1e-5)
    np.testing.assert_array_equal(np.asarray(c), 0.0)
    print("KERNEL_OK")
</pallas_src>

<mosaic_0001>
module attributes {stable_mosaic.version = 11 : i64} {
  func.func @encoder_kernel(%arg0: i32, %arg1: i32, %arg2: memref<8x128xf32, #tpu.memory_space<vmem>>, %arg3: memref<128x128xf32, #tpu.memory_space<vmem>>, %arg4: memref<1x128xf32, #tpu.memory_space<vmem>>, %arg5: memref<128x128xf32, #tpu.memory_space<vmem>>, %arg6: memref<1x128xf32, #tpu.memory_space<vmem>>, %arg7: memref<128x128xf32, #tpu.memory_space<vmem>>, %arg8: memref<1x128xf32, #tpu.memory_space<vmem>>, %arg9: memref<8x128xf32, #tpu.memory_space<vmem>>, %arg10: memref<8x1xf32, #tpu.memory_space<vmem>>) attributes {dimension_semantics = [#tpu.dimension_semantics<parallel>, #tpu.dimension_semantics<arbitrary>], iteration_bounds = array<i64: 2, 3>, scalar_prefetch = 0 : i64, scratch_operands = 1 : i64, tpu.core_type = #tpu.core_type<tc>, window_params = [{transform_indices = @transform_0, window_bounds = array<i64: 8, 128>}, {transform_indices = @transform_1, window_bounds = array<i64: 128, 128>}, {pipeline_mode = #tpu.pipeline_mode<synchronous>, transform_indices = @transform_2, window_bounds = array<i64: 1, 128>}, {pipeline_mode = #tpu.pipeline_mode<synchronous>, transform_indices = @transform_3, window_bounds = array<i64: 128, 128>}, {pipeline_mode = #tpu.pipeline_mode<synchronous>, transform_indices = @transform_4, window_bounds = array<i64: 1, 128>}, {pipeline_mode = #tpu.pipeline_mode<synchronous>, transform_indices = @transform_5, window_bounds = array<i64: 128, 128>}, {pipeline_mode = #tpu.pipeline_mode<synchronous>, transform_indices = @transform_6, window_bounds = array<i64: 1, 128>}, {transform_indices = @transform_7, window_bounds = array<i64: 8, 128>}]} {
    %c0_i32 = arith.constant 0 : i32
    %0 = arith.cmpi eq, %arg1, %c0_i32 : i32
    %1 = arith.extui %0 : i1 to i32
    %c0_i32_0 = arith.constant 0 : i32
    %2 = arith.cmpi ne, %1, %c0_i32_0 : i32
    scf.if %2 {
      %cst_14 = arith.constant 0.000000e+00 : f32
      %18 = vector.broadcast %cst_14 : f32 to vector<8x128xf32>
      %c0_15 = arith.constant 0 : index
      %c0_16 = arith.constant 0 : index
      %19 = vector.load %arg9[%c0_15, %c0_16] : memref<8x128xf32, #tpu.memory_space<vmem>>, vector<8x128xf32>
      tpu.vector_store %arg9[%c0_15, %c0_16], %18 {strides = array<i32>} : memref<8x128xf32, #tpu.memory_space<vmem>>, vector<8x128xf32>,
      %cst_17 = arith.constant 0.000000e+00 : f32
      %20 = vector.broadcast %cst_17 : f32 to vector<8x1xf32>
      %c0_18 = arith.constant 0 : index
      %c0_19 = arith.constant 0 : index
      %21 = vector.load %arg10[%c0_18, %c0_19] : memref<8x1xf32, #tpu.memory_space<vmem>>, vector<8x1xf32>
      tpu.vector_store %arg10[%c0_18, %c0_19], %20 {strides = array<i32>} : memref<8x1xf32, #tpu.memory_space<vmem>>, vector<8x1xf32>,
    } else {
    }
    %c0 = arith.constant 0 : index
    %c0_1 = arith.constant 0 : index
    %3 = vector.load %arg2[%c0, %c0_1] : memref<8x128xf32, #tpu.memory_space<vmem>>, vector<8x128xf32>
    %c0_2 = arith.constant 0 : index
    %c0_3 = arith.constant 0 : index
    %4 = vector.load %arg9[%c0_2, %c0_3] : memref<8x128xf32, #tpu.memory_space<vmem>>, vector<8x128xf32>
    %c0_4 = arith.constant 0 : index
    %c0_5 = arith.constant 0 : index
    %5 = vector.load %arg3[%c0_4, %c0_5] : memref<128x128xf32, #tpu.memory_space<vmem>>, vector<128x128xf32>
    %cst = arith.constant dense<0.000000e+00> : vector<8x128xf32>
    %6 = tpu.matmul %3, %5, %cst {dimension_numbers = #tpu.dot_dimension_numbers<[1], [0], [0], [1], [0, 0, 1, 1], [], []>} : vector<8x128xf32>, vector<128x128xf32>, vector<8x128xf32> -> vector<8x128xf32>
    %7 = arith.addf %4, %6 : vector<8x128xf32>
    %c0_6 = arith.constant 0 : index
    %c0_7 = arith.constant 0 : index
    %8 = vector.load %arg9[%c0_6, %c0_7] : memref<8x128xf32, #tpu.memory_space<vmem>>, vector<8x128xf32>
    tpu.vector_store %arg9[%c0_6, %c0_7], %7 {strides = array<i32>} : memref<8x128xf32, #tpu.memory_space<vmem>>, vector<8x128xf32>,
    %c0_8 = arith.constant 0 : index
    %c0_9 = arith.constant 0 : index
    %9 = vector.load %arg10[%c0_8, %c0_9] : memref<8x1xf32, #tpu.memory_space<vmem>>, vector<8x1xf32>
    %10 = arith.mulf %3, %3 : vector<8x128xf32>
    %cst_10 = arith.constant dense<0.000000e+00> : vector<8xf32>
    %11 = vector.multi_reduction <add>, %10, %cst_10 [1] : vector<8x128xf32> to vector<8xf32>
    %12 = vector.shape_cast %11 : vector<8xf32> to vector<8x1xf32>
    %13 = arith.addf %9, %12 : vector<8x1xf32>
    %c0_11 = arith.constant 0 : index
    %c0_12 = arith.constant 0 : index
    %14 = vector.load %arg10[%c0_11, %c0_12] : memref<8x1xf32, #tpu.memory_space<vmem>>, vector<8x1xf32>
    tpu.vector_store %arg10[%c0_11, %c0_12], %13 {strides = array<i32>} : memref<8x1xf32, #tpu.memory_space<vmem>>, vector<8x1xf32>,
    %c2_i32 = arith.constant 2 : i32
    %15 = arith.cmpi eq, %arg1, %c2_i32 : i32
    %16 = arith.extui %15 : i1 to i32
    %c0_i32_13 = arith.constant 0 : i32
    %17 = arith.cmpi ne, %16, %c0_i32_13 : i32
    scf.if %17 {
      %c0_14 = arith.constant 0 : index
      %c0_15 = arith.constant 0 : index
      %18 = vector.load %arg10[%c0_14, %c0_15] : memref<8x1xf32, #tpu.memory_space<vmem>>, vector<8x1xf32>
      %cst_16 = arith.constant 1.000000e-24 : f32
      %19 = vector.broadcast %cst_16 : f32 to vector<8x1xf32>
      %20 = arith.maximumf %18, %19 : vector<8x1xf32>
      %21 = math.rsqrt %20 : vector<8x1xf32>
      %c0_17 = arith.constant 0 : index
      %c0_18 = arith.constant 0 : index
      %22 = vector.load %arg9[%c0_17, %c0_18] : memref<8x128xf32, #tpu.memory_space<vmem>>, vector<8x128xf32>
      %23 = vector.broadcast %21 : vector<8x1xf32> to vector<8x128xf32>
      %24 = arith.mulf %22, %23 : vector<8x128xf32>
      %c0_19 = arith.constant 0 : index
      %c0_20 = arith.constant 0 : index
      %25 = vector.load %arg4[%c0_19, %c0_20] : memref<1x128xf32, #tpu.memory_space<vmem>>, vector<1x128xf32>
      %26 = vector.broadcast %25 : vector<1x128xf32> to vector<8x128xf32>
      %27 = arith.addf %24, %26 : vector<8x128xf32>
      %28 = math.tanh %27 : vector<8x128xf32>
      %c0_21 = arith.constant 0 : index
      %c0_22 = arith.constant 0 : index
      %29 = vector.load %arg5[%c0_21, %c0_22] : memref<128x128xf32, #tpu.memory_space<vmem>>, vector<128x128xf32>
      %cst_23 = arith.constant dense<0.000000e+00> : vector<8x128xf32>
      %30 = tpu.matmul %28, %29, %cst_23 {dimension_numbers = #tpu.dot_dimension_numbers<[1], [0], [0], [1], [0, 0, 1, 1], [], []>} : vector<8x128xf32>, vector<128x128xf32>, vector<8x128xf32> -> vector<8x128xf32>
      %c0_24 = arith.constant 0 : index
      %c0_25 = arith.constant 0 : index
      %31 = vector.load %arg6[%c0_24, %c0_25] : memref<1x128xf32, #tpu.memory_space<vmem>>, vector<1x128xf32>
      %32 = vector.broadcast %31 : vector<1x128xf32> to vector<8x128xf32>
      %33 = arith.addf %30, %32 : vector<8x128xf32>
      %c0_26 = arith.constant 0 : index
      %c0_27 = arith.constant 0 : index
      %34 = vector.load %arg7[%c0_26, %c0_27] : memref<128x128xf32, #tpu.memory_space<vmem>>, vector<128x128xf32>
      %cst_28 = arith.constant dense<0.000000e+00> : vector<8x128xf32>
      %35 = tpu.matmul %33, %34, %cst_28 {dimension_numbers = #tpu.dot_dimension_numbers<[1], [0], [0], [1], [0, 0, 1, 1], [], []>} : vector<8x128xf32>, vector<128x128xf32>, vector<8x128xf32> -> vector<8x128xf32>
      %c0_29 = arith.constant 0 : index
      %c0_30 = arith.constant 0 : index
      %36 = vector.load %arg8[%c0_29, %c0_30] : memref<1x128xf32, #tpu.memory_space<vmem>>, vector<1x128xf32>
      %37 = vector.broadcast %36 : vector<1x128xf32> to vector<8x128xf32>
      %38 = arith.addf %35, %37 : vector<8x128xf32>
      %39 = math.tanh %38 : vector<8x128xf32>
      %c0_31 = arith.constant 0 : index
      %c0_32 = arith.constant 0 : index
      %40 = vector.load %arg9[%c0_31, %c0_32] : memref<8x128xf32, #tpu.memory_space<vmem>>, vector<8x128xf32>
      tpu.vector_store %arg9[%c0_31, %c0_32], %39 {strides = array<i32>} : memref<8x128xf32, #tpu.memory_space<vmem>>, vector<8x128xf32>,
    } else {
    }
    return
  }
  func.func @transform_0(%arg0: i32, %arg1: i32) -> (i32, i32) {
    %c0_i32 = arith.constant 0 : i32
    return %arg0, %arg1 : i32, i32
  }
  func.func @transform_1(%arg0: i32, %arg1: i32) -> (i32, i32) {
    %c0_i32 = arith.constant 0 : i32
    %c0_i32_0 = arith.constant 0 : i32
    return %arg1, %c0_i32 : i32, i32
  }
  func.func @transform_2(%arg0: i32, %arg1: i32) -> (i32, i32) {
    %c0_i32 = arith.constant 0 : i32
    %c0_i32_0 = arith.constant 0 : i32
    %c0_i32_1 = arith.constant 0 : i32
    return %c0_i32, %c0_i32_0 : i32, i32
  }
  func.func @transform_3(%arg0: i32, %arg1: i32) -> (i32, i32) {
    %c0_i32 = arith.constant 0 : i32
    %c0_i32_0 = arith.constant 0 : i32
    %c0_i32_1 = arith.constant 0 : i32
    return %c0_i32, %c0_i32_0 : i32, i32
  }
  func.func @transform_4(%arg0: i32, %arg1: i32) -> (i32, i32) {
    %c0_i32 = arith.constant 0 : i32
    %c0_i32_0 = arith.constant 0 : i32
    %c0_i32_1 = arith.constant 0 : i32
    return %c0_i32, %c0_i32_0 : i32, i32
  }
  func.func @transform_5(%arg0: i32, %arg1: i32) -> (i32, i32) {
    %c0_i32 = arith.constant 0 : i32
    %c0_i32_0 = arith.constant 0 : i32
    %c0_i32_1 = arith.constant 0 : i32
    return %c0_i32, %c0_i32_0 : i32, i32
  }
  func.func @transform_6(%arg0: i32, %arg1: i32) -> (i32, i32) {
    %c0_i32 = arith.constant 0 : i32
    %c0_i32_0 = arith.constant 0 : i32
    %c0_i32_1 = arith.constant 0 : i32
    return %c0_i32, %c0_i32_0 : i32, i32
  }
  func.func @transform_7(%arg0: i32, %arg1: i32) -> (i32, i32) {
    %c0_i32 = arith.constant 0 : i32
    %c0_i32_0 = arith.constant 0 : i32
    return %arg0, %c0_i32 : i32, i32
  }
}

</mosaic_0001>

<llo_original>
// kernel: tpu_custom_call.1
$region0: #{tpu_custom_call.1}
  #allocation0 [shape = 'u32[]', space=smem, size = 0x4, offset = 0x4, fixed_abs, tag = 'smem constant byte address 0x4 - core index']
  #allocation1 [shape = 'u32[144,128]{1,0:T(1,128)}', space=vmem, size = 0x12000, scoped, tag = 'internal scratch']
  #allocation2 [shape = 'f32[8,1]{1,0:T(8,128)}', space=vmem, size = 0x1000, scoped, tag = 'scratch operand']
  %s0 = inlined_call_operand.hbm [shape: f32[16,384], index: 0, kind: input, shape index: {}]
  %s1 = inlined_call_operand.hbm [shape: f32[384,128], index: 1, kind: input, shape index: {}]
  %s2 = inlined_call_operand.vmem [shape: f32[1,128], index: 2, kind: input, shape index: {}]
  %s3 = inlined_call_operand.hbm [shape: f32[128,128], index: 3, kind: input, shape index: {}]
  %s4 = inlined_call_operand.vmem [shape: f32[1,128], index: 4, kind: input, shape index: {}]
  %s5 = inlined_call_operand.hbm [shape: f32[128,128], index: 5, kind: input, shape index: {}]
  %s6 = inlined_call_operand.vmem [shape: f32[1,128], index: 6, kind: input, shape index: {}]
  %s7 = inlined_call_operand.hbm [shape: f32[16,128], index: 7, kind: output, shape index: {}]
  %s8 = sld [smem:[#allocation0]]
  $region85: #{tpu_custom_call.1} parent=0
    _
  %s10 = ssub.s32 1, %s8
  %s11 = scalar_select 0, %s10, %s8
  $region1: #{tpu_custom_call.1} parent=0
    #allocation3 [shape = 'u8[8192]{0}', space=vmem, size = 0x2000, scoped, tag = 'input window, operand 0']
    #allocation4 [shape = 's32[2]{0}', space=sflag, size = 0x8, scoped, tag = 'scoped memory for tpu_custom_call.1']
    #allocation5 [shape = 's32[2]{0}', space=sflag, size = 0x8, scoped, tag = 'scoped memory for tpu_custom_call.1']
    #allocation6 [shape = 'u8[131072]{0}', space=vmem, size = 0x20000, scoped, tag = 'input window, operand 1']
    #allocation7 [shape = 's32[2]{0}', space=sflag, size = 0x8, scoped, tag = 'scoped memory for tpu_custom_call.1']
    #allocation8 [shape = 'u8[65536]{0}', space=vmem, size = 0x10000, scoped, tag = 'input window, operand 3, single buffered']
    #allocation9 [shape = 'u8[65536]{0}', space=vmem, size = 0x10000, scoped, tag = 'input window, operand 5, single buffered']
    #allocation10 [shape = 's32[1]{0}', space=sflag, size = 0x4, scoped, tag = 'scoped memory for tpu_custom_call.1']
    #allocation11 [shape = 'u8[8192]{0}', space=vmem, size = 0x2000, scoped, tag = 'output window, operand 0']
    %12 = vsyncpa [#allocation4], 0
    %s13 = scalar_lea.sflag [#allocation4], 1
    %14 = vsyncpa %s13, 0
    %15 = vsyncpa [#allocation7], 0
    %s16 = scalar_lea.sflag [#allocation7], 1
    %17 = vsyncpa %s16, 0
    %18 = vsyncpa [#allocation10], 0
    %19 = vsyncpa [#allocation5], 0
    %s20 = scalar_lea.sflag [#allocation5], 1
    %21 = vsyncpa %s20, 0
    loop: start=0, step=1, limit=8
    $region2: #{tpu_custom_call.1} parent=1 // loop_pre_header
      _
    $region3: #{tpu_custom_call.1} parent=1 // loop_header
      %s23 = sphi 0, %s27
      %p24 = scmp.ge.s32.totalorder %s23, 8
      %s30 = sphi 0, %s42
      %s31 = sphi 0, %s38
      %s32 = sphi 0, %s30
      %s33 = sphi 0, %s31
      %s34 = sphi 0, %s32
      %s35 = sphi 0, %s33
      %s47 = sphi 0, %s49
      %s50 = sphi 0, %s47
      %s51 = sphi 0, %s50
      %s67 = sphi 0, %s51
      %s73 = sphi 0, %s75
      %s76 = sphi 0, %s73
      %s77 = sphi 0, %s76
      %s93 = sphi 0, %s77
      %s97 = sphi 0, %s97
      %s99 = sphi 0, %s97
      %s100 = sphi 0, %s99
      %s114 = sphi 0, %s100
      %s118 = sphi 0, %s118
      %s120 = sphi 0, %s118
      %s121 = sphi 0, %s120
      %s135 = sphi 0, %s121
      %s139 = sphi 0, %s139
      %s141 = sphi 0, %s139
      %s142 = sphi 0, %s141
      %s156 = sphi 0, %s142
      %s160 = sphi 0, %s160
      %s162 = sphi 0, %s160
      %s163 = sphi 0, %s162
      %s177 = sphi 0, %s163
      %s181 = sphi 0, %s181
      %s183 = sphi 0, %s181
      %s184 = sphi 0, %s183
      %s198 = sphi 0, %s184
      %s204 = sphi 0, %s206
      %s207 = sphi 0, %s204
      %s208 = sphi 0, %s207
      %s224 = sphi 0, %s208
    $region4: #{tpu_custom_call.1} parent=1 // loop_header_branch
      %26 = sbr.rel (%p24) target = $region8
    $region5: #{tpu_custom_call.1} parent=1 // loop_body
      %s28 = ssub.s32 %s23, 1
      %s29 = ssub.s32 %s23, 2
      %s36 = sadd.s32 1, %s31
      %p37 = scmp.ge.s32.totalorder %s36, 3
      %s38 = scalar_select %p37, 0, %s36
      %s39 = sadd.s32 1, %s30
      %s40 = scalar_select %p37, %s39, %s30
      %p41 = scmp.ge.s32.totalorder %s40, 2
      %s42 = scalar_select %p41, 0, %s40
      %s43 = ssub.s32 %s30, %s42
      %s44 = ssub.s32 %s31, %s38
      %s45 = sor.u32 %s43, %s44
      %p46 = scmp.eq.s32.totalorder %s45, 0
      %s48 = sadd.s32 %s47, 1
      %s49 = scalar_select %p46, %s47, %s48
      %p52 = pneg %p46
      %p53 = scmp.eq.s32.totalorder %s23, 5
      %p54 = por %p52, %p53
      %p55 = scmp.ne.s32.totalorder %s47, %s50
      %p56 = scmp.eq.s32.totalorder %s23, 0
      %p57 = por %p55, %p56
      %p58 = scmp.ne.s32.totalorder %s47, %s50
      %p59 = scmp.eq.s32.totalorder %s28, 5
      %p60 = por %p58, %p59
      %p61 = scmp.ne.s32.totalorder %s50, %s51
      %p62 = scmp.eq.s32.totalorder %s28, 0
      %p63 = por %p61, %p62
      %p64 = scmp.ne.s32.totalorder %s50, %s51
      %p65 = scmp.eq.s32.totalorder %s29, 5
      %p66 = por %p64, %p65
      %p68 = scmp.ne.s32.totalorder %s51, %s67
      %p69 = scmp.eq.s32.totalorder %s29, 0
      %p70 = por %p68, %p69
      %s71 = ssub.s32 %s31, %s38
      %p72 = scmp.eq.s32.totalorder %s71, 0
      %s74 = sadd.s32 %s73, 1
      %s75 = scalar_select %p72, %s73, %s74
      %p78 = pneg %p72
      %p79 = scmp.eq.s32.totalorder %s23, 5
      %p80 = por %p78, %p79
      %p81 = scmp.ne.s32.totalorder %s73, %s76
      %p82 = scmp.eq.s32.totalorder %s23, 0
      %p83 = por %p81, %p82
      %p84 = scmp.ne.s32.totalorder %s73, %s76
      %p85 = scmp.eq.s32.totalorder %s28, 5
      %p86 = por %p84, %p85
      %p87 = scmp.ne.s32.totalorder %s76, %s77
      %p88 = scmp.eq.s32.totalorder %s28, 0
      %p89 = por %p87, %p88
      %p90 = scmp.ne.s32.totalorder %s76, %s77
      %p91 = scmp.eq.s32.totalorder %s29, 5
      %p92 = por %p90, %p91
      %p94 = scmp.ne.s32.totalorder %s77, %s93
      %p95 = scmp.eq.s32.totalorder %s29, 0
      %p96 = por %p94, %p95
      %s98 = sadd.s32 %s97, 1
      %p101 = scmp.eq.s32.totalorder %s23, 5
      %p102 = scmp.ne.s32.totalorder %s97, %s99
      %p103 = scmp.eq.s32.totalorder %s23, 0
      %p104 = por %p102, %p103
      %p105 = scmp.ne.s32.totalorder %s97, %s99
      %p106 = scmp.eq.s32.totalorder %s28, 5
      %p107 = por %p105, %p106
      %p108 = scmp.ne.s32.totalorder %s99, %s100
      %p109 = scmp.eq.s32.totalorder %s28, 0
      %p110 = por %p108, %p109
      %p111 = scmp.ne.s32.totalorder %s99, %s100
      %p112 = scmp.eq.s32.totalorder %s29, 5
      %p113 = por %p111, %p112
      %p115 = scmp.ne.s32.totalorder %s100, %s114
      %p116 = scmp.eq.s32.totalorder %s29, 0
      %p117 = por %p115, %p116
      %s119 = sadd.s32 %s118, 1
      %p122 = scmp.eq.s32.totalorder %s23, 5
      %p123 = scmp.ne.s32.totalorder %s118, %s120
      %p124 = scmp.eq.s32.totalorder %s23, 0
      %p125 = por %p123, %p124
      %p126 = scmp.ne.s32.totalorder %s118, %s120
      %p127 = scmp.eq.s32.totalorder %s28, 5
      %p128 = por %p126, %p127
      %p129 = scmp.ne.s32.totalorder %s120, %s121
      %p130 = scmp.eq.s32.totalorder %s28, 0
      %p131 = por %p129, %p130
      %p132 = scmp.ne.s32.totalorder %s120, %s121
      %p133 = scmp.eq.s32.totalorder %s29, 5
      %p134 = por %p132, %p133
      %p136 = scmp.ne.s32.totalorder %s121, %s135
      %p137 = scmp.eq.s32.totalorder %s29, 0
      %p138 = por %p136, %p137
      %s140 = sadd.s32 %s139, 1
      %p143 = scmp.eq.s32.totalorder %s23, 5
      %p144 = scmp.ne.s32.totalorder %s139, %s141
      %p145 = scmp.eq.s32.totalorder %s23, 0
      %p146 = por %p144, %p145
      %p147 = scmp.ne.s32.totalorder %s139, %s141
      %p148 = scmp.eq.s32.totalorder %s28, 5
      %p149 = por %p147, %p148
      %p150 = scmp.ne.s32.totalorder %s141, %s142
      %p151 = scmp.eq.s32.totalorder %s28, 0
      %p152 = por %p150, %p151
      %p153 = scmp.ne.s32.totalorder %s141, %s142
      %p154 = scmp.eq.s32.totalorder %s29, 5
      %p155 = por %p153, %p154
      %p157 = scmp.ne.s32.totalorder %s142, %s156
      %p158 = scmp.eq.s32.totalorder %s29, 0
      %p159 = por %p157, %p158
      %s161 = sadd.s32 %s160, 1
      %p164 = scmp.eq.s32.totalorder %s23, 5
      %p165 = scmp.ne.s32.totalorder %s160, %s162
      %p166 = scmp.eq.s32.totalorder %s23, 0
      %p167 = por %p165, %p166
      %p168 = scmp.ne.s32.totalorder %s160, %s162
      %p169 = scmp.eq.s32.totalorder %s28, 5
      %p170 = por %p168, %p169
      %p171 = scmp.ne.s32.totalorder %s162, %s163
      %p172 = scmp.eq.s32.totalorder %s28, 0
      %p173 = por %p171, %p172
      %p174 = scmp.ne.s32.totalorder %s162, %s163
      %p175 = scmp.eq.s32.totalorder %s29, 5
      %p176 = por %p174, %p175
      %p178 = scmp.ne.s32.totalorder %s163, %s177
      %p179 = scmp.eq.s32.totalorder %s29, 0
      %p180 = por %p178, %p179
      %s182 = sadd.s32 %s181, 1
      %p185 = scmp.eq.s32.totalorder %s23, 5
      %p186 = scmp.ne.s32.totalorder %s181, %s183
      %p187 = scmp.eq.s32.totalorder %s23, 0
      %p188 = por %p186, %p187
      %p189 = scmp.ne.s32.totalorder %s181, %s183
      %p190 = scmp.eq.s32.totalorder %s28, 5
      %p191 = por %p189, %p190
      %p192 = scmp.ne.s32.totalorder %s183, %s184
      %p193 = scmp.eq.s32.totalorder %s28, 0
      %p194 = por %p192, %p193
      %p195 = scmp.ne.s32.totalorder %s183, %s184
      %p196 = scmp.eq.s32.totalorder %s29, 5
      %p197 = por %p195, %p196
      %p199 = scmp.ne.s32.totalorder %s184, %s198
      %p200 = scmp.eq.s32.totalorder %s29, 0
      %p201 = por %p199, %p200
      %s202 = ssub.s32 %s30, %s42
      %p203 = scmp.eq.s32.totalorder %s202, 0
      %s205 = sadd.s32 %s204, 1
      %s206 = scalar_select %p203, %s204, %s205
      %p209 = pneg %p203
      %p210 = scmp.eq.s32.totalorder %s23, 5
      %p211 = por %p209, %p210
      %p212 = scmp.ne.s32.totalorder %s204, %s207
      %p213 = scmp.eq.s32.totalorder %s23, 0
      %p214 = por %p212, %p213
      %p215 = scmp.ne.s32.totalorder %s204, %s207
      %p216 = scmp.eq.s32.totalorder %s28, 5
      %p217 = por %p215, %p216
      %p218 = scmp.ne.s32.totalorder %s207, %s208
      %p219 = scmp.eq.s32.totalorder %s28, 0
      %p220 = por %p218, %p219
      %p221 = scmp.ne.s32.totalorder %s207, %s208
      %p222 = scmp.eq.s32.totalorder %s29, 5
      %p223 = por %p221, %p222
      %p225 = scmp.ne.s32.totalorder %s208, %s224
      %p226 = scmp.eq.s32.totalorder %s29, 0
      %p227 = por %p225, %p226
      %p228 = scmp.le.s32.totalorder 1, %s23
      %p229 = scmp.lt.s32.totalorder %s23, 7
      %p230 = pnand %p228, %p229
      %p231 = pneg %p230
      // Predicated region
      $region9: #{tpu_custom_call.1} parent=5 // pred_check
        _
      $region10: #{tpu_custom_call.1} parent=5 // pred_check_branch
        %233 = sbr.rel (%p230) target = $region12
      $region11: #{tpu_custom_call.1} parent=5 // pred_region
        %s234 = ssub.s32 %s23, 1
        // Predicated region
        $region13: #{tpu_custom_call.1} parent=11 // pred_check
          %p235 = pneg %p110
        $region14: #{tpu_custom_call.1} parent=11 // pred_check_branch
          %237 = sbr.rel (%p235) target = $region16
        $region15: #{tpu_custom_call.1} parent=11 // pred_region
          _
        $region16: #{tpu_custom_call.1} parent=11 // pred_fallthru
          _
        // Predicated region
        $region17: #{tpu_custom_call.1} parent=11 // pred_check
          %p238 = pneg %p131
        $region18: #{tpu_custom_call.1} parent=11 // pred_check_branch
          %240 = sbr.rel (%p238) target = $region20
        $region19: #{tpu_custom_call.1} parent=11 // pred_region
          %s242 = ssub.s32 2048, 2048
          %243 = vsyncadd [#allocation7], %s242
          %s244 = sshll.u32 [#allocation8], 4
          %s245 = int_to_ptr.vmem [resolvable:$true] %s244
          %250 = dma.hbm_to_vmem [thread:$0]  %s3, 2048, %s245, [#allocation7], 128, 128, 8
        $region20: #{tpu_custom_call.1} parent=11 // pred_fallthru
          _
        // Predicated region
        $region21: #{tpu_custom_call.1} parent=11 // pred_check
          %p251 = pneg %p152
        $region22: #{tpu_custom_call.1} parent=11 // pred_check_branch
          %253 = sbr.rel (%p251) target = $region24
        $region23: #{tpu_custom_call.1} parent=11 // pred_region
          _
        $region24: #{tpu_custom_call.1} parent=11 // pred_fallthru
          _
        // Predicated region
        $region25: #{tpu_custom_call.1} parent=11 // pred_check
          %p254 = pneg %p173
        $region26: #{tpu_custom_call.1} parent=11 // pred_check_branch
          %256 = sbr.rel (%p254) target = $region28
        $region27: #{tpu_custom_call.1} parent=11 // pred_region
          %s258 = ssub.s32 2048, 2048
          %259 = vsyncadd [#allocation10], %s258
          %s260 = sshll.u32 [#allocation9], 4
          %s261 = int_to_ptr.vmem [resolvable:$true] %s260
          %266 = dma.hbm_to_vmem [thread:$0]  %s5, 2048, %s261, [#allocation10], 128, 128, 8
        $region28: #{tpu_custom_call.1} parent=11 // pred_fallthru
          _
        // Predicated region
        $region29: #{tpu_custom_call.1} parent=11 // pred_check
          %p267 = pneg %p194
        $region30: #{tpu_custom_call.1} parent=11 // pred_check_branch
          %269 = sbr.rel (%p267) target = $region32
        $region31: #{tpu_custom_call.1} parent=11 // pred_region
          _
        $region32: #{tpu_custom_call.1} parent=11 // pred_fallthru
          _
      $region12: #{tpu_custom_call.1} parent=5 // pred_fallthru
        _
      %p270 = scmp.lt.s32.totalorder %s23, 6
      // Predicated region
      $region33: #{tpu_custom_call.1} parent=5 // pred_check
        %p271 = pneg %p270
      $region34: #{tpu_custom_call.1} parent=5 // pred_check_branch
        %273 = sbr.rel (%p271) target = $region36
      $region35: #{tpu_custom_call.1} parent=5 // pred_region
        // Predicated region
        $region37: #{tpu_custom_call.1} parent=35 // pred_check
          %p274 = pneg %p57
        $region38: #{tpu_custom_call.1} parent=35 // pred_check_branch
          %276 = sbr.rel (%p274) target = $region40
        $region39: #{tpu_custom_call.1} parent=35 // pred_region
          %s277 = sand.u32 %s47, 1
          %s278 = scalar_lea.sflag [#allocation4], %s277
          %s279 = sand.u32 %s47, 1
          %s280 = smul.addr %s279, 8
          %s281 = scalar_lea.vmem [#allocation3], %s280
          %s283 = ssub.s32 128, 128
          %284 = vsyncadd %s278, %s283
          %s285 = smul.addr %s30, 3
          %s286 = sadd.s32 %s31, %s285
          %s287 = smul.addr %s286, 128
          %s288 = scalar_lea.hbm %s0, %s287
          %s290 = sshll.u32 %s281, 4
          %s291 = int_to_ptr.vmem [resolvable:$true] %s290
          %293 = dma.hbm_to_vmem [thread:$0]  %s288, 128, %s291, %s278
        $region40: #{tpu_custom_call.1} parent=35 // pred_fallthru
          _
        // Predicated region
        $region41: #{tpu_custom_call.1} parent=35 // pred_check
          %p294 = pneg %p83
        $region42: #{tpu_custom_call.1} parent=35 // pred_check_branch
          %296 = sbr.rel (%p294) target = $region44
        $region43: #{tpu_custom_call.1} parent=35 // pred_region
          %s297 = sand.u32 %s23, 1
          %s298 = scalar_lea.sflag [#allocation7], %s297
          %s299 = sand.u32 %s73, 1
          %s300 = smul.addr %s299, 128
          %s301 = scalar_lea.vmem [#allocation6], %s300
          %s302 = smul.u32 16, %s31
          %s304 = ssub.s32 2048, 2048
          %305 = vsyncadd %s298, %s304
          %s306 = smul.addr %s302, 128
          %s307 = scalar_lea.hbm %s1, %s306
          %s308 = sshll.u32 %s301, 4
          %s309 = int_to_ptr.vmem [resolvable:$true] %s308
          %314 = dma.hbm_to_vmem [thread:$0]  %s307, 2048, %s309, %s298, 128, 128, 8
        $region44: #{tpu_custom_call.1} parent=35 // pred_fallthru
          _
      $region36: #{tpu_custom_call.1} parent=5 // pred_fallthru
        _
      %p315 = scmp.le.s32.totalorder 1, %s23
      %p316 = scmp.lt.s32.totalorder %s23, 7
      %p317 = pnand %p315, %p316
      %p318 = pneg %p317
      // Predicated region
      $region45: #{tpu_custom_call.1} parent=5 // pred_check
        _
      $region46: #{tpu_custom_call.1} parent=5 // pred_check_branch
        %320 = sbr.rel (%p317) target = $region48
      $region47: #{tpu_custom_call.1} parent=5 // pred_region
        %s321 = ssub.s32 %s23, 1
        %s322 = sand.u32 %s50, 1
        %s323 = scalar_lea.sflag [#allocation4], %s322
        %s324 = sand.u32 %s50, 1
        %s325 = smul.addr %s324, 8
        %s326 = scalar_lea.vmem [#allocation3], %s325
        // Predicated region
        $region49: #{tpu_custom_call.1} parent=47 // pred_check
          %p327 = pneg %p63
        $region50: #{tpu_custom_call.1} parent=47 // pred_check_branch
          %329 = sbr.rel (%p327) target = $region52
        $region51: #{tpu_custom_call.1} parent=47 // pred_region
          %330 = dma.done %s323, 128
        $region52: #{tpu_custom_call.1} parent=47 // pred_fallthru
          _
        %s331 = sand.u32 %s28, 1
        %s332 = scalar_lea.sflag [#allocation7], %s331
        %s333 = sand.u32 %s76, 1
        %s334 = smul.addr %s333, 128
        %s335 = scalar_lea.vmem [#allocation6], %s334
        // Predicated region
        $region53: #{tpu_custom_call.1} parent=47 // pred_check
          %p336 = pneg %p89
        $region54: #{tpu_custom_call.1} parent=47 // pred_check_branch
          %338 = sbr.rel (%p336) target = $region56
        $region55: #{tpu_custom_call.1} parent=47 // pred_region
          %339 = dma.done %s332, 2048
        $region56: #{tpu_custom_call.1} parent=47 // pred_fallthru
          _
        // Predicated region
        $region57: #{tpu_custom_call.1} parent=47 // pred_check
          %p340 = pneg %p131
        $region58: #{tpu_custom_call.1} parent=47 // pred_check_branch
          %342 = sbr.rel (%p340) target = $region60
        $region59: #{tpu_custom_call.1} parent=47 // pred_region
          %343 = dma.done [#allocation7], 2048
        $region60: #{tpu_custom_call.1} parent=47 // pred_fallthru
          _
        // Predicated region
        $region61: #{tpu_custom_call.1} parent=47 // pred_check
          %p344 = pneg %p173
        $region62: #{tpu_custom_call.1} parent=47 // pred_check_branch
          %346 = sbr.rel (%p344) target = $region64
        $region63: #{tpu_custom_call.1} parent=47 // pred_region
          %347 = dma.done [#allocation10], 2048
        $region64: #{tpu_custom_call.1} parent=47 // pred_fallthru
          _
        %s348 = sand.u32 %s50, 1
        %s349 = scalar_lea.sflag [#allocation4], %s348
        %s350 = sand.u32 %s50, 1
        %s351 = smul.addr %s350, 8
        %s352 = scalar_lea.vmem [#allocation3], %s351
        %p353 = pneg %p63
        %p354 = pneg %p60
        %s355 = sand.u32 %s28, 1
        %s356 = scalar_lea.sflag [#allocation7], %s355
        %s357 = sand.u32 %s76, 1
        %s358 = smul.addr %s357, 128
        %s359 = scalar_lea.vmem [#allocation6], %s358
        %p360 = pneg %p89
        %p361 = pneg %p86
        %p362 = pneg %p110
        %p363 = pneg %p107
        %p364 = pneg %p131
        %p365 = pneg %p128
        %p366 = pneg %p152
        %p367 = pneg %p149
        %p368 = pneg %p173
        %p369 = pneg %p170
        %p370 = pneg %p194
        %p371 = pneg %p191
        %p372 = pneg %p220
        %p373 = pneg %p217
        %s374 = sand.u32 %s207, 1
        %s375 = scalar_lea.sflag [#allocation5], %s374
        %s376 = sand.u32 %s207, 1
        %s377 = smul.addr %s376, 8
        %s378 = scalar_lea.vmem [#allocation11], %s377
        %s379 = smul.u32 16, %s33
        %p380 = scmp.eq.s32.totalorder %s33, 0
        // Predicated region
        $region65: #{tpu_custom_call.1} parent=47 // pred_check
          %p381 = pneg %p380
        $region66: #{tpu_custom_call.1} parent=47 // pred_check_branch
          %383 = sbr.rel (%p381) target = $region68
        $region67: #{tpu_custom_call.1} parent=47 // pred_region
          %384 = vst [vmem:[%s378] sm:$0xff] 0.0
          %vm385 = vcmask 7168
          %386 = vst.msk [vmem:[#allocation2] sm:$0xff] %vm385, 0.0
        $region68: #{tpu_custom_call.1} parent=47 // pred_fallthru
          _
        %v387 = vld [vmem:[%s326] sm:$0xff]
        %v388 = vld [vmem:[%s378] sm:$0xff]
        %v389 = vld [vmem:[%s335] sm:$0xff]
        %v390 = vld [vmem:[%s335 + $0x8] sm:$0xff]
        %v391 = vld [vmem:[%s335 + $0x10] sm:$0xff]
        %v392 = vld [vmem:[%s335 + $0x18] sm:$0xff]
        %v393 = vld [vmem:[%s335 + $0x20] sm:$0xff]
        %v394 = vld [vmem:[%s335 + $0x28] sm:$0xff]
        %v395 = vld [vmem:[%s335 + $0x30] sm:$0xff]
        %v396 = vld [vmem:[%s335 + $0x38] sm:$0xff]
        %v397 = vld [vmem:[%s335 + $0x40] sm:$0xff]
        %v398 = vld [vmem:[%s335 + $0x48] sm:$0xff]
        %v399 = vld [vmem:[%s335 + $0x50] sm:$0xff]
        %v400 = vld [vmem:[%s335 + $0x58] sm:$0xff]
        %v401 = vld [vmem:[%s335 + $0x60] sm:$0xff]
        %v402 = vld [vmem:[%s335 + $0x68] sm:$0xff]
        %v403 = vld [vmem:[%s335 + $0x70] sm:$0xff]
        %v404 = vld [vmem:[%s335 + $0x78] sm:$0xff]
        %405 = vmatprep.subr.mxu0 0.0
        %406 = vmatpush1.msra.mxu0 %v404
        %407 = vmatprep.subr.mxu0 0.0
        %408 = vmatpush1.msra.mxu0 %v403
        %409 = vmatprep.subr.mxu0 0.0
        %410 = vmatpush1.msra.mxu0 %v402
        %411 = vmatprep.subr.mxu0 0.0
        %412 = vmatpush1.msra.mxu0 %v401
        %413 = vmatprep.subr.mxu0 0.0
        %414 = vmatpush1.msra.mxu0 %v400
        %415 = vmatprep.subr.mxu0 0.0
        %416 = vmatpush1.msra.mxu0 %v399
        %417 = vmatprep.subr.mxu0 0.0
        %418 = vmatpush1.msra.mxu0 %v398
        %419 = vmatprep.subr.mxu0 0.0
        %420 = vmatpush1.msra.mxu0 %v397
        %421 = vmatprep.subr.mxu0 0.0
        %422 = vmatpush1.msra.mxu0 %v396
        %423 = vmatprep.subr.mxu0 0.0
        %424 = vmatpush1.msra.mxu0 %v395
        %425 = vmatprep.subr.mxu0 0.0
        %426 = vmatpush1.msra.mxu0 %v394
        %427 = vmatprep.subr.mxu0 0.0
        %428 = vmatpush1.msra.mxu0 %v393
        %429 = vmatprep.subr.mxu0 0.0
        %430 = vmatpush1.msra.mxu0 %v392
        %431 = vmatprep.subr.mxu0 0.0
        %432 = vmatpush1.msra.mxu0 %v391
        %433 = vmatprep.subr.mxu0 0.0
        %434 = vmatpush1.msra.mxu0 %v390
        %435 = vmatprep.subr.mxu0 0.0
        %436 = vmatpush1.msra.mxu0 %v389
        %437 = vmatprep.subr.mxu0 0.0
        %438 = vmatpush2.msra.mxu0 0.0
        %439 = vmatprep.subr.mxu0 0.0
        %440 = vmatpush2.msra.mxu0 0.0
        %441 = vmatprep.subr.mxu0 0.0
        %442 = vmatpush2.msra.mxu0 0.0
        %443 = vmatprep.subr.mxu0 0.0
        %444 = vmatpush2.msra.mxu0 0.0
        %445 = vmatprep.subr.mxu0 0.0
        %446 = vmatpush2.msra.mxu0 0.0
        %447 = vmatprep.subr.mxu0 0.0
        %448 = vmatpush2.msra.mxu0 0.0
        %449 = vmatprep.subr.mxu0 0.0
        %450 = vmatpush2.msra.mxu0 0.0
        %451 = vmatprep.subr.mxu0 0.0
        %452 = vmatpush2.msra.mxu0 0.0
        %453 = vmatprep.subr.mxu0 0.0
        %454 = vmatpush2.msra.mxu0 0.0
        %455 = vmatprep.subr.mxu0 0.0
        %456 = vmatpush2.msra.mxu0 0.0
        %457 = vmatprep.subr.mxu0 0.0
        %458 = vmatpush2.msra.mxu0 0.0
        %459 = vmatprep.subr.mxu0 0.0
        %460 = vmatpush2.msra.mxu0 0.0
        %461 = vmatprep.subr.mxu0 0.0
        %462 = vmatpush2.msra.mxu0 0.0
        %463 = vmatprep.subr.mxu0 0.0
        %464 = vmatpush2.msra.mxu0 0.0
        %465 = vmatprep.subr.mxu0 0.0
        %466 = vmatpush2.msra.mxu0 0.0
        %467 = vmatprep.subr.mxu0 0.0
        %468 = vmatpush2.msra.mxu0 0.0
        %469 = vmatprep.mubr.f32.mxu0 0.0
        %470 = vmatmul.mubr.f32.gmra.mxu0 %v387
        %v471 = vpop.f32.mrf.mxu0
        %v472 = vadd.f32 0.0, %v471
        %v473 = vpop.f32.mrf.mxu0
        %474 = vdwg.mxu0
        %v475 = vadd.f32 %v388, %v472
        %476 = vst [vmem:[%s378] sm:$0xff] %v475
        %v477 = vld [vmem:[#allocation2] sm:$0xff]
        %v478 = vmul.f32 %v387, %v387
        %479 = vadd.xlane.f32.xlu0 %v478
        %v480 = vpop.xlane.xlu0 %479
        %v481 = vadd.f32 %v477, %v480
        %vm482 = vcmask 7168
        %483 = vst.msk [vmem:[#allocation2] sm:$0xff] %vm482, %v481
        %p484 = scmp.eq.s32.totalorder %s33, 2
        // Predicated region
        $region69: #{tpu_custom_call.1} parent=47 // pred_check
          %p485 = pneg %p484
        $region70: #{tpu_custom_call.1} parent=47 // pred_check_branch
          %487 = sbr.rel (%p485) target = $region72
        $region71: #{tpu_custom_call.1} parent=47 // pred_region
          %v488 = vld [vmem:[#allocation2] sm:$0xff]
          %v489 = vmax.f32 %v488, 1e-24
          %v490 = vrsqrt.pop %v489
          %v491 = vld [vmem:[%s378] sm:$0xff]
          %493 = vset.pattern.permute.xlu0 0
          %494 = vperm.xlu0 %493, %v490
          %v495 = vpop.permute.xlu0 %494
          %v497 = vmul.f32 %v491, %v495
          %v498 = vld [vmem:[%s2] sm:$0x1]
          %v500 = vlaneseq
          %v501 = vshrl.u32 %v500, 7
          %v502 = vsub.s32 0, %v501
          %v503 = vrot.slane %v498, %v502
          %v505 = vadd.f32 %v497, %v503
          %v506 = vtanh.pop %v505
          %v507 = vld [vmem:[#allocation8] sm:$0xff]
          %v508 = vld [vmem:[#allocation8 + $0x8] sm:$0xff]
          %v509 = vld [vmem:[#allocation8 + $0x10] sm:$0xff]
          %v510 = vld [vmem:[#allocation8 + $0x18] sm:$0xff]
          %v511 = vld [vmem:[#allocation8 + $0x20] sm:$0xff]
          %v512 = vld [vmem:[#allocation8 + $0x28] sm:$0xff]
          %v513 = vld [vmem:[#allocation8 + $0x30] sm:$0xff]
          %v514 = vld [vmem:[#allocation8 + $0x38] sm:$0xff]
          %v515 = vld [vmem:[#allocation8 + $0x40] sm:$0xff]
          %v516 = vld [vmem:[#allocation8 + $0x48] sm:$0xff]
          %v517 = vld [vmem:[#allocation8 + $0x50] sm:$0xff]
          %v518 = vld [vmem:[#allocation8 + $0x58] sm:$0xff]
          %v519 = vld [vmem:[#allocation8 + $0x60] sm:$0xff]
          %v520 = vld [vmem:[#allocation8 + $0x68] sm:$0xff]
          %v521 = vld [vmem:[#allocation8 + $0x70] sm:$0xff]
          %v522 = vld [vmem:[#allocation8 + $0x78] sm:$0xff]
          %v523 = vld [vmem:[%s4] sm:$0x1]
          %v525 = vlaneseq
          %v526 = vshrl.u32 %v525, 7
          %v527 = vsub.s32 0, %v526
          %v528 = vrot.slane %v523, %v527
          %530 = vmatprep.subr.mxu0 0.0
          %531 = vmatpush1.msra.mxu0 %v522
          %532 = vmatprep.subr.mxu0 0.0
          %533 = vmatpush1.msra.mxu0 %v521
          %534 = vmatprep.subr.mxu0 0.0
          %535 = vmatpush1.msra.mxu0 %v520
          %536 = vmatprep.subr.mxu0 0.0
          %537 = vmatpush1.msra.mxu0 %v519
          %538 = vmatprep.subr.mxu0 0.0
          %539 = vmatpush1.msra.mxu0 %v518
          %540 = vmatprep.subr.mxu0 0.0
          %541 = vmatpush1.msra.mxu0 %v517
          %542 = vmatprep.subr.mxu0 0.0
          %543 = vmatpush1.msra.mxu0 %v516
          %544 = vmatprep.subr.mxu0 0.0
          %545 = vmatpush1.msra.mxu0 %v515
          %546 = vmatprep.subr.mxu0 0.0
          %547 = vmatpush1.msra.mxu0 %v514
          %548 = vmatprep.subr.mxu0 0.0
          %549 = vmatpush1.msra.mxu0 %v513
          %550 = vmatprep.subr.mxu0 0.0
          %551 = vmatpush1.msra.mxu0 %v512
          %552 = vmatprep.subr.mxu0 0.0
          %553 = vmatpush1.msra.mxu0 %v511
          %554 = vmatprep.subr.mxu0 0.0
          %555 = vmatpush1.msra.mxu0 %v510
          %556 = vmatprep.subr.mxu0 0.0
          %557 = vmatpush1.msra.mxu0 %v509
          %558 = vmatprep.subr.mxu0 0.0
          %559 = vmatpush1.msra.mxu0 %v508
          %560 = vmatprep.subr.mxu0 0.0
          %561 = vmatpush1.msra.mxu0 %v507
          %562 = vmatprep.subr.mxu0 0.0
          %563 = vmatpush2.msra.mxu0 0.0
          %564 = vmatprep.subr.mxu0 0.0
          %565 = vmatpush2.msra.mxu0 0.0
          %566 = vmatprep.subr.mxu0 0.0
          %567 = vmatpush2.msra.mxu0 0.0
          %568 = vmatprep.subr.mxu0 0.0
          %569 = vmatpush2.msra.mxu0 0.0
          %570 = vmatprep.subr.mxu0 0.0
          %571 = vmatpush2.msra.mxu0 0.0
          %572 = vmatprep.subr.mxu0 0.0
          %573 = vmatpush2.msra.mxu0 0.0
          %574 = vmatprep.subr.mxu0 0.0
          %575 = vmatpush2.msra.mxu0 0.0
          %576 = vmatprep.subr.mxu0 0.0
          %577 = vmatpush2.msra.mxu0 0.0
          %578 = vmatprep.subr.mxu0 0.0
          %579 = vmatpush2.msra.mxu0 0.0
          %580 = vmatprep.subr.mxu0 0.0
          %581 = vmatpush2.msra.mxu0 0.0
          %582 = vmatprep.subr.mxu0 0.0
          %583 = vmatpush2.msra.mxu0 0.0
          %584 = vmatprep.subr.mxu0 0.0
          %585 = vmatpush2.msra.mxu0 0.0
          %586 = vmatprep.subr.mxu0 0.0
          %587 = vmatpush2.msra.mxu0 0.0
          %588 = vmatprep.subr.mxu0 0.0
          %589 = vmatpush2.msra.mxu0 0.0
          %590 = vmatprep.subr.mxu0 0.0
          %591 = vmatpush2.msra.mxu0 0.0
          %592 = vmatprep.subr.mxu0 0.0
          %593 = vmatpush2.msra.mxu0 0.0
          %594 = vmatprep.mubr.f32.mxu0 0.0
          %595 = vmatmul.mubr.f32.gmra.mxu0 %v506
          %v596 = vpop.f32.mrf.mxu0
          %v597 = vadd.f32 %v528, %v596
          %v598 = vpop.f32.mrf.mxu0
          %599 = vdwg.mxu0
          %v600 = vld [vmem:[#allocation9] sm:$0xff]
          %v601 = vld [vmem:[#allocation9 + $0x8] sm:$0xff]
          %v602 = vld [vmem:[#allocation9 + $0x10] sm:$0xff]
          %v603 = vld [vmem:[#allocation9 + $0x18] sm:$0xff]
          %v604 = vld [vmem:[#allocation9 + $0x20] sm:$0xff]
          %v605 = vld [vmem:[#allocation9 + $0x28] sm:$0xff]
          %v606 = vld [vmem:[#allocation9 + $0x30] sm:$0xff]
          %v607 = vld [vmem:[#allocation9 + $0x38] sm:$0xff]
          %v608 = vld [vmem:[#allocation9 + $0x40] sm:$0xff]
          %v609 = vld [vmem:[#allocation9 + $0x48] sm:$0xff]
          %v610 = vld [vmem:[#allocation9 + $0x50] sm:$0xff]
          %v611 = vld [vmem:[#allocation9 + $0x58] sm:$0xff]
          %v612 = vld [vmem:[#allocation9 + $0x60] sm:$0xff]
          %v613 = vld [vmem:[#allocation9 + $0x68] sm:$0xff]
          %v614 = vld [vmem:[#allocation9 + $0x70] sm:$0xff]
          %v615 = vld [vmem:[#allocation9 + $0x78] sm:$0xff]
          %v616 = vld [vmem:[%s6] sm:$0x1]
          %v618 = vlaneseq
          %v619 = vshrl.u32 %v618, 7
          %v620 = vsub.s32 0, %v619
          %v621 = vrot.slane %v616, %v620
          %623 = vmatprep.subr.mxu0 0.0
          %624 = vmatpush1.msra.mxu0 %v615
          %625 = vmatprep.subr.mxu0 0.0
          %626 = vmatpush1.msra.mxu0 %v614
          %627 = vmatprep.subr.mxu0 0.0
          %628 = vmatpush1.msra.mxu0 %v613
          %629 = vmatprep.subr.mxu0 0.0
          %630 = vmatpush1.msra.mxu0 %v612
          %631 = vmatprep.subr.mxu0 0.0
          %632 = vmatpush1.msra.mxu0 %v611
          %633 = vmatprep.subr.mxu0 0.0
          %634 = vmatpush1.msra.mxu0 %v610
          %635 = vmatprep.subr.mxu0 0.0
          %636 = vmatpush1.msra.mxu0 %v609
          %637 = vmatprep.subr.mxu0 0.0
          %638 = vmatpush1.msra.mxu0 %v608
          %639 = vmatprep.subr.mxu0 0.0
          %640 = vmatpush1.msra.mxu0 %v607
          %641 = vmatprep.subr.mxu0 0.0
          %642 = vmatpush1.msra.mxu0 %v606
          %643 = vmatprep.subr.mxu0 0.0
          %644 = vmatpush1.msra.mxu0 %v605
          %645 = vmatprep.subr.mxu0 0.0
          %646 = vmatpush1.msra.mxu0 %v604
          %647 = vmatprep.subr.mxu0 0.0
          %648 = vmatpush1.msra.mxu0 %v603
          %649 = vmatprep.subr.mxu0 0.0
          %650 = vmatpush1.msra.mxu0 %v602
          %651 = vmatprep.subr.mxu0 0.0
          %652 = vmatpush1.msra.mxu0 %v601
          %653 = vmatprep.subr.mxu0 0.0
          %654 = vmatpush1.msra.mxu0 %v600
          %655 = vmatprep.subr.mxu0 0.0
          %656 = vmatpush2.msra.mxu0 0.0
          %657 = vmatprep.subr.mxu0 0.0
          %658 = vmatpush2.msra.mxu0 0.0
          %659 = vmatprep.subr.mxu0 0.0
          %660 = vmatpush2.msra.mxu0 0.0
          %661 = vmatprep.subr.mxu0 0.0
          %662 = vmatpush2.msra.mxu0 0.0
          %663 = vmatprep.subr.mxu0 0.0
          %664 = vmatpush2.msra.mxu0 0.0
          %665 = vmatprep.subr.mxu0 0.0
          %666 = vmatpush2.msra.mxu0 0.0
          %667 = vmatprep.subr.mxu0 0.0
          %668 = vmatpush2.msra.mxu0 0.0
          %669 = vmatprep.subr.mxu0 0.0
          %670 = vmatpush2.msra.mxu0 0.0
          %671 = vmatprep.subr.mxu0 0.0
          %672 = vmatpush2.msra.mxu0 0.0
          %673 = vmatprep.subr.mxu0 0.0
          %674 = vmatpush2.msra.mxu0 0.0
          %675 = vmatprep.subr.mxu0 0.0
          %676 = vmatpush2.msra.mxu0 0.0
          %677 = vmatprep.subr.mxu0 0.0
          %678 = vmatpush2.msra.mxu0 0.0
          %679 = vmatprep.subr.mxu0 0.0
          %680 = vmatpush2.msra.mxu0 0.0
          %681 = vmatprep.subr.mxu0 0.0
          %682 = vmatpush2.msra.mxu0 0.0
          %683 = vmatprep.subr.mxu0 0.0
          %684 = vmatpush2.msra.mxu0 0.0
          %685 = vmatprep.subr.mxu0 0.0
          %686 = vmatpush2.msra.mxu0 0.0
          %687 = vmatprep.mubr.f32.mxu0 0.0
          %688 = vmatmul.mubr.f32.gmra.mxu0 %v597
          %v689 = vpop.f32.mrf.mxu0
          %v690 = vadd.f32 %v621, %v689
          %v691 = vpop.f32.mrf.mxu0
          %692 = vdwg.mxu0
          %v693 = vtanh.pop %v690
          %694 = vst [vmem:[%s378] sm:$0xff] %v693
        $region72: #{tpu_custom_call.1} parent=47 // pred_fallthru
          _
        %s695 = sand.u32 %s207, 1
        %s696 = scalar_lea.sflag [#allocation5], %s695
        %s697 = sand.u32 %s207, 1
        %s698 = smul.addr %s697, 8
        %s699 = scalar_lea.vmem [#allocation11], %s698
        // Predicated region
        $region73: #{tpu_custom_call.1} parent=47 // pred_check
          %p700 = pneg %p217
        $region74: #{tpu_custom_call.1} parent=47 // pred_check_branch
          %702 = sbr.rel (%p700) target = $region76
        $region75: #{tpu_custom_call.1} parent=47 // pred_region
          %s704 = ssub.s32 128, 128
          %705 = vsyncadd %s696, %s704
          %s706 = smul.addr %s32, 128
          %s707 = scalar_lea.hbm %s7, %s706
          %s709 = sshll.u32 %s699, 4
          %s710 = int_to_ptr.vmem [resolvable:$true] %s709
          %712 = dma.vmem_to_hbm [thread:$0]  %s710, 128, %s707, %s696
        $region76: #{tpu_custom_call.1} parent=47 // pred_fallthru
          _
      $region48: #{tpu_custom_call.1} parent=5 // pred_fallthru
        _
      %p713 = scmp.le.s32.totalorder 2, %s23
      // Predicated region
      $region77: #{tpu_custom_call.1} parent=5 // pred_check
        %p714 = pneg %p713
      $region78: #{tpu_custom_call.1} parent=5 // pred_check_branch
        %716 = sbr.rel (%p714) target = $region80
      $region79: #{tpu_custom_call.1} parent=5 // pred_region
        %s717 = ssub.s32 %s23, 2
        // Predicated region
        $region81: #{tpu_custom_call.1} parent=79 // pred_check
          %p718 = pneg %p223
        $region82: #{tpu_custom_call.1} parent=79 // pred_check_branch
          %720 = sbr.rel (%p718) target = $region84
        $region83: #{tpu_custom_call.1} parent=79 // pred_region
          %s721 = sand.u32 %s208, 1
          %s722 = scalar_lea.sflag [#allocation5], %s721
          %s723 = sand.u32 %s208, 1
          %s724 = smul.addr %s723, 8
          %s725 = scalar_lea.vmem [#allocation11], %s724
          %726 = dma.done %s722, 128
        $region84: #{tpu_custom_call.1} parent=79 // pred_fallthru
          _
      $region80: #{tpu_custom_call.1} parent=5 // pred_fallthru
        _
    $region6: #{tpu_custom_call.1} parent=1 // loop_footer
      %s27 = sadd.s32 1, %s23
    $region7: #{tpu_custom_call.1} parent=1 // loop_footer_branch
      %22 = sbr.rel target = $region3
    $region8: #{tpu_custom_call.1} parent=1 // loop_exit
      _
    %727 = vsyncpa [#allocation4], 1
    %s728 = scalar_lea.sflag [#allocation4], 1
    %729 = vsyncpa %s728, 1
    %730 = vsyncpa [#allocation7], 1
    %s731 = scalar_lea.sflag [#allocation7], 1
    %732 = vsyncpa %s731, 1
    %733 = vsyncpa [#allocation10], 1
    %734 = vsyncpa [#allocation5], 1
    %s735 = scalar_lea.sflag [#allocation5], 1
    %736 = vsyncpa %s735, 1

</llo_original>
